<compile_context>
chip_gen: v5e
topology: v5e:2x2
jax: 0.10.0
libtpu: 0.0.40
codegen_flags: <defaults>
</compile_context>

<pallas_src>
import functools

import jax
import jax.numpy as jnp
from jax.experimental import pallas as pl
from jax.experimental.pallas import tpu as pltpu

_LANE = 128
_SUBLANE = 8


def _round_up(x, m):
    return (x + m - 1) // m * m


def _dbn_fused_kernel(x_ref, w_ref, b_ref, o_ref, *, n_layers):
    """x_ref: (tm, F)  w_ref: (L, F, F)  b_ref: (L, 1, F)  o_ref: (tm, F).

    Zero-padding invariant: rows >= n_visible of each W and padded bias lanes
    are zero, so the sigmoid(0)=0.5 values produced in padded activation lanes
    contribute nothing to the next layer's valid lanes.
    """
    act = x_ref[...]
    for l in range(n_layers):  # static unroll: all layers in one kernel, no HBM hops
        z = jnp.dot(act, w_ref[l], preferred_element_type=jnp.float32)  # MXU
        act = jax.nn.sigmoid(z + b_ref[l])  # already in [0,1]; clamp is redundant
    o_ref[...] = act


def dbn_forward_fused(x_pad, w_stack, b_stack, out_dim, *, tm_cap=256):
    """Run the fused DBN stack. x_pad is (B, F) with feature dim already padded."""
    B, F = x_pad.shape
    L, Fw, Fw2 = w_stack.shape
    assert F == Fw == Fw2

    # Pad batch to a sublane multiple; cap the row tile so double-buffering
    # stays inside the v7x 64 MiB VMEM budget at realistic batch sizes.
    B_pad = _round_up(max(B, _SUBLANE), _SUBLANE)
    if B_pad != B:
        x_pad = jnp.pad(x_pad, ((0, B_pad - B), (0, 0)))
    tm = min(B_pad, tm_cap)
    grid = (pl.cdiv(B_pad, tm),)

    kernel = functools.partial(_dbn_fused_kernel, n_layers=L)
    out = pl.pallas_call(
        kernel,
        out_shape=jax.ShapeDtypeStruct((B_pad, F), jnp.float32),
        grid_spec=pltpu.PrefetchScalarGridSpec(
            num_scalar_prefetch=0,
            grid=grid,
            in_specs=[
                pl.BlockSpec((tm, F), lambda i: (i, 0)),      # x row tile
                pl.BlockSpec((L, F, F), lambda i: (0, 0, 0)),  # full weight stack (VMEM resident)
                pl.BlockSpec((L, 1, F), lambda i: (0, 0, 0)),  # full bias stack
            ],
            out_specs=pl.BlockSpec((tm, F), lambda i: (i, 0)),  # lane-dense (F % 128 == 0)
        ),
        compiler_params=pltpu.CompilerParams(
            dimension_semantics=("parallel",)),  # batch tiles split across TCs
    )(x_pad, w_stack, b_stack)
    return out[:B, :out_dim]


class DBNPallas:
    """JAX/Pallas equivalent of the PyTorch DBN module (forward pass only)."""

    def __init__(self, layers, key):
        self.layers = list(layers)
        self.params = []
        for i in range(len(layers) - 1):
            key, sub = jax.random.split(key)
            W = 0.01 * jax.random.normal(
                sub, (layers[i], layers[i + 1]), dtype=jnp.float32)
            h_bias = jnp.zeros((layers[i + 1],), dtype=jnp.float32)
            # v_bias exists in the torch module but is unused in forward().
            v_bias = jnp.zeros((layers[i],), dtype=jnp.float32)
            self.params.append((W, h_bias, v_bias))

        # Pack all layers into one lane-dense padded slab for the fused kernel.
        F = _round_up(max(self.layers), _LANE)
        L = len(self.params)
        w_stack = jnp.zeros((L, F, F), dtype=jnp.float32)
        b_stack = jnp.zeros((L, 1, F), dtype=jnp.float32)
        for l, (W, hb, _vb) in enumerate(self.params):
            V, H = W.shape
            w_stack = w_stack.at[l, :V, :H].set(W)
            b_stack = b_stack.at[l, 0, :H].set(hb)
        self._F = F
        self._w_stack = w_stack
        self._b_stack = b_stack

    def forward(self, x):
        B, V = x.shape
        assert V == self.layers[0]
        x_pad = jnp.pad(x.astype(jnp.float32), ((0, 0), (0, self._F - V)))
        return dbn_forward_fused(
            x_pad, self._w_stack, self._b_stack, self.layers[-1])


if __name__ == "__main__":
    key = jax.random.PRNGKey(0)
    key, xkey = jax.random.split(key)

    # Small shapes consistent with the module: batch=8, layers 32 -> 64 -> 16.
    layers = [32, 64, 16]
    batch = 8
    x = jax.random.normal(xkey, (batch, layers[0]), dtype=jnp.float32)

    dbn = DBNPallas(layers, key)
    out = jax.block_until_ready(dbn.forward(x))

    # Pure-JAX reference check (same math, no Pallas, unpadded).
    ref = x
    for (W, h_bias, _vb) in dbn.params:
        ref = jnp.clip(jax.nn.sigmoid(ref @ W + h_bias), 0.0, 1.0)
    assert out.shape == (batch, layers[-1])
    assert jnp.allclose(out, ref, atol=1e-5, rtol=1e-5)

    print("KERNEL_OK")
</pallas_src>

<mosaic_0001>
module attributes {stable_mosaic.version = 11 : i64} {
  func.func @_dbn_fused_kernel(%arg0: i32, %arg1: memref<8x128xf32, #tpu.memory_space<vmem>>, %arg2: memref<2x128x128xf32, #tpu.memory_space<vmem>>, %arg3: memref<2x1x128xf32, #tpu.memory_space<vmem>>, %arg4: memref<8x128xf32, #tpu.memory_space<vmem>>) attributes {dimension_semantics = [#tpu.dimension_semantics<parallel>], iteration_bounds = array<i64: 1>, scalar_prefetch = 0 : i64, scratch_operands = 0 : i64, tpu.core_type = #tpu.core_type<tc>, window_params = [{transform_indices = @transform_0, window_bounds = array<i64: 8, 128>}, {pipeline_mode = #tpu.pipeline_mode<synchronous>, transform_indices = @transform_1, window_bounds = array<i64: 2, 128, 128>}, {pipeline_mode = #tpu.pipeline_mode<synchronous>, transform_indices = @transform_2, window_bounds = array<i64: 2, 1, 128>}, {transform_indices = @transform_3, window_bounds = array<i64: 8, 128>}]} {
    %c0 = arith.constant 0 : index
    %c0_0 = arith.constant 0 : index
    %0 = vector.load %arg1[%c0, %c0_0] : memref<8x128xf32, #tpu.memory_space<vmem>>, vector<8x128xf32>
    %c0_1 = arith.constant 0 : index
    %c0_2 = arith.constant 0 : index
    %c0_3 = arith.constant 0 : index
    %1 = vector.load %arg2[%c0_1, %c0_2, %c0_3] : memref<2x128x128xf32, #tpu.memory_space<vmem>>, vector<1x128x128xf32>
    %2 = vector.shape_cast %1 : vector<1x128x128xf32> to vector<128x128xf32>
    %cst = arith.constant dense<0.000000e+00> : vector<8x128xf32>
    %3 = tpu.matmul %0, %2, %cst {dimension_numbers = #tpu.dot_dimension_numbers<[1], [0], [0], [1], [0, 0, 1, 1], [], []>} : vector<8x128xf32>, vector<128x128xf32>, vector<8x128xf32> -> vector<8x128xf32>
    %c0_4 = arith.constant 0 : index
    %c0_5 = arith.constant 0 : index
    %c0_6 = arith.constant 0 : index
    %4 = vector.load %arg3[%c0_4, %c0_5, %c0_6] : memref<2x1x128xf32, #tpu.memory_space<vmem>>, vector<1x1x128xf32>
    %5 = vector.shape_cast %4 : vector<1x1x128xf32> to vector<1x128xf32>
    %6 = vector.broadcast %5 : vector<1x128xf32> to vector<8x128xf32>
    %7 = arith.addf %3, %6 : vector<8x128xf32>
    %8 = arith.negf %7 : vector<8x128xf32>
    %9 = math.exp %8 : vector<8x128xf32>
    %cst_7 = arith.constant 1.000000e+00 : f32
    %10 = vector.broadcast %cst_7 : f32 to vector<8x128xf32>
    %11 = arith.addf %10, %9 : vector<8x128xf32>
    %12 = arith.divf %10, %11 : vector<8x128xf32>
    %c1 = arith.constant 1 : index
    %c0_8 = arith.constant 0 : index
    %c0_9 = arith.constant 0 : index
    %13 = vector.load %arg2[%c1, %c0_8, %c0_9] : memref<2x128x128xf32, #tpu.memory_space<vmem>>, vector<1x128x128xf32>
    %14 = vector.shape_cast %13 : vector<1x128x128xf32> to vector<128x128xf32>
    %cst_10 = arith.constant dense<0.000000e+00> : vector<8x128xf32>
    %15 = tpu.matmul %12, %14, %cst_10 {dimension_numbers = #tpu.dot_dimension_numbers<[1], [0], [0], [1], [0, 0, 1, 1], [], []>} : vector<8x128xf32>, vector<128x128xf32>, vector<8x128xf32> -> vector<8x128xf32>
    %c1_11 = arith.constant 1 : index
    %c0_12 = arith.constant 0 : index
    %c0_13 = arith.constant 0 : index
    %16 = vector.load %arg3[%c1_11, %c0_12, %c0_13] : memref<2x1x128xf32, #tpu.memory_space<vmem>>, vector<1x1x128xf32>
    %17 = vector.shape_cast %16 : vector<1x1x128xf32> to vector<1x128xf32>
    %18 = vector.broadcast %17 : vector<1x128xf32> to vector<8x128xf32>
    %19 = arith.addf %15, %18 : vector<8x128xf32>
    %20 = arith.negf %19 : vector<8x128xf32>
    %21 = math.exp %20 : vector<8x128xf32>
    %cst_14 = arith.constant 1.000000e+00 : f32
    %22 = vector.broadcast %cst_14 : f32 to vector<8x128xf32>
    %23 = arith.addf %22, %21 : vector<8x128xf32>
    %24 = arith.divf %22, %23 : vector<8x128xf32>
    %c0_15 = arith.constant 0 : index
    %c0_16 = arith.constant 0 : index
    %25 = vector.load %arg4[%c0_15, %c0_16] : memref<8x128xf32, #tpu.memory_space<vmem>>, vector<8x128xf32>
    tpu.vector_store %arg4[%c0_15, %c0_16], %24 {strides = array<i32>} : memref<8x128xf32, #tpu.memory_space<vmem>>, vector<8x128xf32>,
    return
  }
  func.func @transform_0(%arg0: i32) -> (i32, i32) {
    %c0_i32 = arith.constant 0 : i32
    %c0_i32_0 = arith.constant 0 : i32
    return %arg0, %c0_i32 : i32, i32
  }
  func.func @transform_1(%arg0: i32) -> (i32, i32, i32) {
    %c0_i32 = arith.constant 0 : i32
    %c0_i32_0 = arith.constant 0 : i32
    %c0_i32_1 = arith.constant 0 : i32
    %c0_i32_2 = arith.constant 0 : i32
    return %c0_i32, %c0_i32_0, %c0_i32_1 : i32, i32, i32
  }
  func.func @transform_2(%arg0: i32) -> (i32, i32, i32) {
    %c0_i32 = arith.constant 0 : i32
    %c0_i32_0 = arith.constant 0 : i32
    %c0_i32_1 = arith.constant 0 : i32
    %c0_i32_2 = arith.constant 0 : i32
    return %c0_i32, %c0_i32_0, %c0_i32_1 : i32, i32, i32
  }
  func.func @transform_3(%arg0: i32) -> (i32, i32) {
    %c0_i32 = arith.constant 0 : i32
    %c0_i32_0 = arith.constant 0 : i32
    return %arg0, %c0_i32 : i32, i32
  }
}

</mosaic_0001>

<llo_original>
// kernel: tpu_custom_call.1
$region0: #{tpu_custom_call.1}
  #allocation0 [shape = 'u32[]', space=smem, size = 0x4, offset = 0x4, fixed_abs, tag = 'smem constant byte address 0x4 - core index']
  #allocation1 [shape = 'u32[72,128]{1,0:T(1,128)}', space=vmem, size = 0x9000, scoped, tag = 'internal scratch']
  %s0 = inlined_call_operand.hbm [shape: f32[8,128], index: 0, kind: input, shape index: {}]
  %s1 = inlined_call_operand.hbm [shape: f32[2,128,128], index: 1, kind: input, shape index: {}]
  %s2 = inlined_call_operand.hbm [shape: f32[2,1,128], index: 2, kind: input, shape index: {}]
  %s3 = inlined_call_operand.hbm [shape: f32[8,128], index: 3, kind: output, shape index: {}]
  %s4 = sld [smem:[#allocation0]]
  $region34: #{tpu_custom_call.1} parent=0
    _
  %s6 = ssub.s32 1, %s4
  %s7 = scalar_select 0, %s6, %s4
  $region1: #{tpu_custom_call.1} parent=0
    #allocation2 [shape = 'u8[4096]{0}', space=vmem, size = 0x1000, scoped, tag = 'input window, operand 0, single buffered']
    #allocation3 [shape = 's32[1]{0}', space=sflag, size = 0x4, scoped, tag = 'scoped memory for tpu_custom_call.1']
    #allocation4 [shape = 's32[1]{0}', space=sflag, size = 0x4, scoped, tag = 'scoped memory for tpu_custom_call.1']
    #allocation5 [shape = 'u8[131072]{0}', space=vmem, size = 0x20000, scoped, tag = 'input window, operand 1, single buffered']
    #allocation6 [shape = 's32[1]{0}', space=sflag, size = 0x4, scoped, tag = 'scoped memory for tpu_custom_call.1']
    #allocation7 [shape = 'u8[1024]{0}', space=vmem, size = 0x400, scoped, tag = 'input window, operand 2, single buffered']
    #allocation8 [shape = 'u8[4096]{0}', space=vmem, size = 0x1000, scoped, tag = 'output window, operand 0, single buffered']
    %8 = vsyncpa [#allocation3], 0
    %9 = vsyncpa [#allocation6], 0
    %10 = vsyncpa [#allocation4], 0
    // Predicated region
    $region2: #{tpu_custom_call.1} parent=1 // pred_check
      _
    $region3: #{tpu_custom_call.1} parent=1 // pred_check_branch
      %12 = sbr.rel (0) target = $region5
    $region4: #{tpu_custom_call.1} parent=1 // pred_region
      %14 = vsyncadd [#allocation3], 0
      %s16 = sshll.u32 %s0, 4
      %s17 = int_to_ptr.hbm [resolvable:$true] %s16
      %s18 = sshll.u32 [#allocation2], 4
      %s19 = int_to_ptr.vmem [resolvable:$true] %s18
      %21 = dma.hbm_to_vmem [thread:$0]  %s17, 128, %s19, [#allocation3]
    $region5: #{tpu_custom_call.1} parent=1 // pred_fallthru
      _
    // Predicated region
    $region6: #{tpu_custom_call.1} parent=1 // pred_check
      _
    $region7: #{tpu_custom_call.1} parent=1 // pred_check_branch
      %23 = sbr.rel (0) target = $region9
    $region8: #{tpu_custom_call.1} parent=1 // pred_region
      %25 = vsyncadd [#allocation6], 0
      %s26 = sshll.u32 %s1, 4
      %s27 = int_to_ptr.hbm [resolvable:$true] %s26
      %s28 = sshll.u32 [#allocation5], 4
      %s29 = int_to_ptr.vmem [resolvable:$true] %s28
      %34 = dma.hbm_to_vmem [thread:$0]  %s27, 4096, %s29, [#allocation6], 128, 128, 8
    $region9: #{tpu_custom_call.1} parent=1 // pred_fallthru
      _
    // Predicated region
    $region10: #{tpu_custom_call.1} parent=1 // pred_check
      _
    $region11: #{tpu_custom_call.1} parent=1 // pred_check_branch
      %36 = sbr.rel (0) target = $region13
    $region12: #{tpu_custom_call.1} parent=1 // pred_region
      %38 = vsyncadd [#allocation6], 0
      %s39 = sshll.u32 %s2, 4
      %s40 = int_to_ptr.hbm [resolvable:$true] %s39
      %s41 = sshll.u32 [#allocation7], 4
      %s42 = int_to_ptr.vmem [resolvable:$true] %s41
      %47 = dma.hbm_to_vmem [thread:$0]  %s40, 32, %s42, [#allocation6], 16, 16, 1
    $region13: #{tpu_custom_call.1} parent=1 // pred_fallthru
      _
    // Predicated region
    $region14: #{tpu_custom_call.1} parent=1 // pred_check
      _
    $region15: #{tpu_custom_call.1} parent=1 // pred_check_branch
      %49 = sbr.rel (0) target = $region17
    $region16: #{tpu_custom_call.1} parent=1 // pred_region
      %51 = dma.done [#allocation3], 128
    $region17: #{tpu_custom_call.1} parent=1 // pred_fallthru
      _
    // Predicated region
    $region18: #{tpu_custom_call.1} parent=1 // pred_check
      _
    $region19: #{tpu_custom_call.1} parent=1 // pred_check_branch
      %53 = sbr.rel (0) target = $region21
    $region20: #{tpu_custom_call.1} parent=1 // pred_region
      %55 = dma.done [#allocation6], 4096
    $region21: #{tpu_custom_call.1} parent=1 // pred_fallthru
      _
    // Predicated region
    $region22: #{tpu_custom_call.1} parent=1 // pred_check
      _
    $region23: #{tpu_custom_call.1} parent=1 // pred_check_branch
      %57 = sbr.rel (0) target = $region25
    $region24: #{tpu_custom_call.1} parent=1 // pred_region
      %59 = dma.done [#allocation6], 32
    $region25: #{tpu_custom_call.1} parent=1 // pred_fallthru
      _
    %v60 = vld [vmem:[#allocation2] sm:$0xff]
    %v61 = vld [vmem:[#allocation5] sm:$0xff]
    %v62 = vld [vmem:[#allocation5 + $0x8] sm:$0xff]
    %v63 = vld [vmem:[#allocation5 + $0x10] sm:$0xff]
    %v64 = vld [vmem:[#allocation5 + $0x18] sm:$0xff]
    %v65 = vld [vmem:[#allocation5 + $0x20] sm:$0xff]
    %v66 = vld [vmem:[#allocation5 + $0x28] sm:$0xff]
    %v67 = vld [vmem:[#allocation5 + $0x30] sm:$0xff]
    %v68 = vld [vmem:[#allocation5 + $0x38] sm:$0xff]
    %v69 = vld [vmem:[#allocation5 + $0x40] sm:$0xff]
    %v70 = vld [vmem:[#allocation5 + $0x48] sm:$0xff]
    %v71 = vld [vmem:[#allocation5 + $0x50] sm:$0xff]
    %v72 = vld [vmem:[#allocation5 + $0x58] sm:$0xff]
    %v73 = vld [vmem:[#allocation5 + $0x60] sm:$0xff]
    %v74 = vld [vmem:[#allocation5 + $0x68] sm:$0xff]
    %v75 = vld [vmem:[#allocation5 + $0x70] sm:$0xff]
    %v76 = vld [vmem:[#allocation5 + $0x78] sm:$0xff]
    %v77 = vld [vmem:[#allocation7] sm:$0x1]
    %v79 = vperm.slane %v77, 0
    %81 = vmatpush.msra.mxu0 %v76
    %82 = vmatpush.msra.mxu0 %v75
    %83 = vmatpush.msra.mxu0 %v74
    %84 = vmatpush.msra.mxu0 %v73
    %85 = vmatpush.msra.mxu0 %v72
    %86 = vmatpush.msra.mxu0 %v71
    %87 = vmatpush.msra.mxu0 %v70
    %88 = vmatpush.msra.mxu0 %v69
    %89 = vmatpush.msra.mxu0 %v68
    %90 = vmatpush.msra.mxu0 %v67
    %91 = vmatpush.msra.mxu0 %v66
    %92 = vmatpush.msra.mxu0 %v65
    %93 = vmatpush.msra.mxu0 %v64
    %94 = vmatpush.msra.mxu0 %v63
    %95 = vmatpush.msra.mxu0 %v62
    %96 = vmatpush.msra.mxu0 %v61
    %97 = vmatmul.f32.gmra.mxu0 %v60
    %v98 = vpop.f32.mrf.mxu0
    %v99 = vadd.f32 %v79, %v98
    %100 = vdwg.mxu0
    %v101 = vxor.u32 %v99, 2147483648
    %v102 = vmul.f32 %v101, 1.442695
    %v103 = vpow.pop %v102
    %v104 = vadd.f32 %v103, 1.0
    %v105 = vrcp.pop %v104
    %v106 = vmul.f32 %v104, %v105
    %v107 = vsub.f32 1.0, %v106
    %v108 = vmul.f32 %v105, %v107
    %v109 = vadd.f32 %v105, %v108
    %vm110 = vweird.f32 %v104
    %vm111 = vweird.f32 %v105
    %vm112 = vmor %vm110, %vm111
    %v113 = vsel %vm112, %v105, %v109
    %v114 = vand.u32 2147483647, %v104
    %vm115 = vcmp.eq.f32.partialorder %v114, 8.507059e+37
    %v116 = vand.u32 %v104, 2147483648
    %v117 = vor.u32 1.1754944e-38, %v116
    %v118 = vsel %vm115, %v117, %v113
    %v119 = vmul.f32 1.0, %v118
    %s120 = scalar_lea.vmem [#allocation5], 128
    %v121 = vld [vmem:[%s120] sm:$0xff]
    %v122 = vld [vmem:[%s120 + $0x8] sm:$0xff]
    %v123 = vld [vmem:[%s120 + $0x10] sm:$0xff]
    %v124 = vld [vmem:[%s120 + $0x18] sm:$0xff]
    %v125 = vld [vmem:[%s120 + $0x20] sm:$0xff]
    %v126 = vld [vmem:[%s120 + $0x28] sm:$0xff]
    %v127 = vld [vmem:[%s120 + $0x30] sm:$0xff]
    %v128 = vld [vmem:[%s120 + $0x38] sm:$0xff]
    %v129 = vld [vmem:[%s120 + $0x40] sm:$0xff]
    %v130 = vld [vmem:[%s120 + $0x48] sm:$0xff]
    %v131 = vld [vmem:[%s120 + $0x50] sm:$0xff]
    %v132 = vld [vmem:[%s120 + $0x58] sm:$0xff]
    %v133 = vld [vmem:[%s120 + $0x60] sm:$0xff]
    %v134 = vld [vmem:[%s120 + $0x68] sm:$0xff]
    %v135 = vld [vmem:[%s120 + $0x70] sm:$0xff]
    %v136 = vld [vmem:[%s120 + $0x78] sm:$0xff]
    %s137 = scalar_lea.vmem [#allocation7], 1
    %v138 = vld [vmem:[%s137] sm:$0x1]
    %v140 = vperm.slane %v138, 0
    %142 = vmatpush.msra.mxu0 %v136
    %143 = vmatpush.msra.mxu0 %v135
    %144 = vmatpush.msra.mxu0 %v134
    %145 = vmatpush.msra.mxu0 %v133
    %146 = vmatpush.msra.mxu0 %v132
    %147 = vmatpush.msra.mxu0 %v131
    %148 = vmatpush.msra.mxu0 %v130
    %149 = vmatpush.msra.mxu0 %v129
    %150 = vmatpush.msra.mxu0 %v128
    %151 = vmatpush.msra.mxu0 %v127
    %152 = vmatpush.msra.mxu0 %v126
    %153 = vmatpush.msra.mxu0 %v125
    %154 = vmatpush.msra.mxu0 %v124
    %155 = vmatpush.msra.mxu0 %v123
    %156 = vmatpush.msra.mxu0 %v122
    %157 = vmatpush.msra.mxu0 %v121
    %158 = vmatmul.f32.gmra.mxu0 %v119
    %v159 = vpop.f32.mrf.mxu0
    %v160 = vadd.f32 %v140, %v159
    %161 = vdwg.mxu0
    %v162 = vxor.u32 %v160, 2147483648
    %v163 = vmul.f32 %v162, 1.442695
    %v164 = vpow.pop %v163
    %v165 = vadd.f32 %v164, 1.0
    %v166 = vrcp.pop %v165
    %v167 = vmul.f32 %v165, %v166
    %v168 = vsub.f32 1.0, %v167
    %v169 = vmul.f32 %v166, %v168
    %v170 = vadd.f32 %v166, %v169
    %vm171 = vweird.f32 %v165
    %vm172 = vweird.f32 %v166
    %vm173 = vmor %vm171, %vm172
    %v174 = vsel %vm173, %v166, %v170
    %v175 = vand.u32 2147483647, %v165
    %vm176 = vcmp.eq.f32.partialorder %v175, 8.507059e+37
    %v177 = vand.u32 %v165, 2147483648
    %v178 = vor.u32 1.1754944e-38, %v177
    %v179 = vsel %vm176, %v178, %v174
    %v180 = vmul.f32 1.0, %v179
    %181 = vst [vmem:[#allocation8] sm:$0xff] %v180
    // Predicated region
    $region26: #{tpu_custom_call.1} parent=1 // pred_check
      _
    $region27: #{tpu_custom_call.1} parent=1 // pred_check_branch
      %183 = sbr.rel (0) target = $region29
    $region28: #{tpu_custom_call.1} parent=1 // pred_region
      %185 = vsyncadd [#allocation4], 0
      %s187 = sshll.u32 [#allocation8], 4
      %s188 = int_to_ptr.vmem [resolvable:$true] %s187
      %s189 = sshll.u32 %s3, 4
      %s190 = int_to_ptr.hbm [resolvable:$true] %s189
      %192 = dma.vmem_to_hbm [thread:$0]  %s188, 128, %s190, [#allocation4]
    $region29: #{tpu_custom_call.1} parent=1 // pred_fallthru
      _
    // Predicated region
    $region30: #{tpu_custom_call.1} parent=1 // pred_check
      _
    $region31: #{tpu_custom_call.1} parent=1 // pred_check_branch
      %194 = sbr.rel (0) target = $region33
    $region32: #{tpu_custom_call.1} parent=1 // pred_region
      %196 = dma.done [#allocation4], 128
    $region33: #{tpu_custom_call.1} parent=1 // pred_fallthru
      _
    %197 = vsyncpa [#allocation3], 1
    %198 = vsyncpa [#allocation6], 1
    %199 = vsyncpa [#allocation4], 1

</llo_original>
